<compile_context>
chip_gen: v5e
topology: v5e:2x2
jax: 0.10.0
libtpu: 0.0.40
codegen_flags: <defaults>
</compile_context>

<pallas_src>
import math
from functools import partial

import jax
import jax.numpy as jnp
from jax.experimental import pallas as pl
from jax.experimental.pallas import tpu as pltpu

LEAK_MEM = 0.95
THRESHOLD = 0.3

LANE = 512                       # lane-dense last dim (multiple of 128)
MAX_BLOCK_ROWS = 2048            # 4 MiB f32 block at (2048, 512)
_VMEM_LIMIT = 32 * 1024 * 1024   # scoped-VMEM request; safe on v5e/v6e/v7x


# ----------------------------------------------------------------------------
# Slab (flattening / geometry) helpers
# ----------------------------------------------------------------------------
def _round_up(x, m):
    return ((x + m - 1) // m) * m


def _slab_geometry(num_elems):
    """Return (rows_padded, block_rows) for a lane-dense (rows, LANE) slab.

    * rows split as evenly as possible (no round_up(rows, block_rows) blow-up);
    * zero row padding whenever the even split divides rows and is 8-aligned;
    * >= 2 row tiles once rows >= 64 so both v7x TensorCores get work;
    * block_rows always a multiple of 8 (sublane alignment), 32 when padded
      (int8 sublane packing).
    """
    rows = max(1, -(-num_elems // LANE))
    n_tiles = -(-rows // MAX_BLOCK_ROWS)
    if rows >= 64:
        n_tiles = max(n_tiles, 2)          # keep both v7x TCs busy
    base = -(-rows // n_tiles)
    if rows % n_tiles == 0 and base % 8 == 0:
        return rows, base                  # exact split -> zero row padding
    if n_tiles == 1:
        block_rows = _round_up(rows, 8)    # tiny tensors: <= 7 padded rows
        return block_rows, block_rows
    block_rows = _round_up(base, 32)       # 32: int8 sublane packing
    rows_padded = _round_up(rows, block_rows)
    return rows_padded, block_rows


def _pad_to_slab(flat, rows_padded, lane):
    """(..., n) -> (..., rows_padded, lane). Pure reshape when no padding."""
    lead = flat.shape[:-1]
    n = flat.shape[-1]
    pad = rows_padded * lane - n
    if pad:
        flat = jnp.pad(flat, [(0, 0)] * len(lead) + [(0, pad)])
    return flat.reshape(lead + (rows_padded, lane))


def _from_slab(slab, num_elems, out_shape):
    """Inverse of _pad_to_slab. Pure reshape when no padding was added."""
    lead = slab.shape[:-2]
    rows, lane = slab.shape[-2:]
    flat = slab.reshape(lead + (rows * lane,))
    if rows * lane != num_elems:
        flat = flat[..., :num_elems]
    return flat.reshape(out_shape)


# ----------------------------------------------------------------------------
# Shared LIF update (cast x to f32 inside the kernel; spikes as int8 0/1)
# ----------------------------------------------------------------------------
def _lif_update(v_prev, x):
    v_new = LEAK_MEM * v_prev + (1.0 - LEAK_MEM) * x.astype(jnp.float32)
    fired = v_new > THRESHOLD
    return fired.astype(jnp.int8), jnp.where(fired, 0.0, v_new)


# ----------------------------------------------------------------------------
# Single-step kernel (tiled, pipelined, aliased membrane buffer)
# ----------------------------------------------------------------------------
def _step_kernel(v_ref, x_ref, spikes_ref, v_out_ref):
    spikes, v_reset = _lif_update(v_ref[...], x_ref[...])
    spikes_ref[...] = spikes
    v_out_ref[...] = v_reset


def _spiking_step_slab(v_slab, x_slab, block_rows):
    rows, lane = v_slab.shape
    x_bytes = x_slab.dtype.itemsize
    return pl.pallas_call(
        _step_kernel,
        out_shape=(
            jax.ShapeDtypeStruct((rows, lane), jnp.int8),     # spikes (0/1)
            jax.ShapeDtypeStruct((rows, lane), jnp.float32),  # reset membrane
        ),
        grid_spec=pltpu.PrefetchScalarGridSpec(
            num_scalar_prefetch=0,
            grid=(rows // block_rows,),
            in_specs=[
                pl.BlockSpec((block_rows, lane), lambda r: (r, 0)),
                pl.BlockSpec((block_rows, lane), lambda r: (r, 0)),
            ],
            out_specs=[
                pl.BlockSpec((block_rows, lane), lambda r: (r, 0)),
                pl.BlockSpec((block_rows, lane), lambda r: (r, 0)),
            ],
        ),
        compiler_params=pltpu.CompilerParams(
            dimension_semantics=("parallel",),
            vmem_limit_bytes=_VMEM_LIMIT),
        cost_estimate=pl.CostEstimate(
            flops=4 * rows * lane,
            transcendentals=0,
            bytes_accessed=rows * lane * (4 + x_bytes + 1 + 4)),
        input_output_aliases={0: 1},  # reuse membrane input buffer for v_out
    )(v_slab, x_slab)


@jax.jit
def _jit_step(v_slab, x):
    """One spiking step: returns (spikes int8, v f32, new membrane slab)."""
    num_elems = math.prod(x.shape)
    rows_padded, block_rows = _slab_geometry(num_elems)
    x_slab = _pad_to_slab(x.reshape(-1), rows_padded, LANE)  # native dtype
    spikes_slab, v_slab_new = _spiking_step_slab(v_slab, x_slab, block_rows)
    spikes = _from_slab(spikes_slab, num_elems, x.shape)
    v = _from_slab(v_slab_new, num_elems, x.shape)
    return spikes, v, v_slab_new


# ----------------------------------------------------------------------------
# Fused multi-step kernels: membrane state resident in VMEM across time
# ----------------------------------------------------------------------------
def _fused_kernel_sv(x_ref, spikes_ref, v_out_ref, v_scr):
    @pl.when(pl.program_id(1) == 0)
    def _():
        v_scr[...] = jnp.zeros_like(v_scr)

    spikes, v_reset = _lif_update(v_scr[...], x_ref[...])
    v_scr[...] = v_reset
    spikes_ref[...] = spikes
    v_out_ref[...] = v_reset


def _fused_kernel_s(x_ref, spikes_ref, v_scr):
    @pl.when(pl.program_id(1) == 0)
    def _():
        v_scr[...] = jnp.zeros_like(v_scr)

    spikes, v_reset = _lif_update(v_scr[...], x_ref[...])
    v_scr[...] = v_reset
    spikes_ref[...] = spikes


def _spiking_simulate_slab(x_seq_slab, block_rows, emit_v):
    num_steps, rows, lane = x_seq_slab.shape
    x_bytes = x_seq_slab.dtype.itemsize
    blk = (pl.Squeezed(), block_rows, lane)   # kernel sees (block_rows, lane)
    idx = lambda r, t: (t, r, 0)

    if emit_v:
        kernel = _fused_kernel_sv
        out_shape = (jax.ShapeDtypeStruct((num_steps, rows, lane), jnp.int8),
                     jax.ShapeDtypeStruct((num_steps, rows, lane), jnp.float32))
        out_specs = (pl.BlockSpec(blk, idx), pl.BlockSpec(blk, idx))
        out_bytes = 1 + 4
    else:
        kernel = _fused_kernel_s
        out_shape = jax.ShapeDtypeStruct((num_steps, rows, lane), jnp.int8)
        out_specs = pl.BlockSpec(blk, idx)
        out_bytes = 1

    return pl.pallas_call(
        kernel,
        out_shape=out_shape,
        grid_spec=pltpu.PrefetchScalarGridSpec(
            num_scalar_prefetch=0,
            grid=(rows // block_rows, num_steps),  # time last ("arbitrary")
            in_specs=[pl.BlockSpec(blk, idx)],
            out_specs=out_specs,
            scratch_shapes=[pltpu.VMEM((block_rows, lane), jnp.float32)],
        ),
        compiler_params=pltpu.CompilerParams(
            dimension_semantics=("parallel", "arbitrary"),
            vmem_limit_bytes=_VMEM_LIMIT),
        cost_estimate=pl.CostEstimate(
            flops=4 * num_steps * rows * lane,
            transcendentals=0,
            bytes_accessed=num_steps * rows * lane * (x_bytes + out_bytes)),
    )(x_seq_slab)


@partial(jax.jit, static_argnames=("return_v",))
def _jit_simulate(x_seq, return_v=True):
    """Run all T steps fused: x_seq (T, ...) -> spikes int8 (+ v f32)."""
    num_steps = x_seq.shape[0]
    x_shape = x_seq.shape[1:]
    num_elems = math.prod(x_shape)
    rows_padded, block_rows = _slab_geometry(num_elems)
    x_slab = _pad_to_slab(x_seq.reshape(num_steps, num_elems), rows_padded, LANE)
    out = _spiking_simulate_slab(x_slab, block_rows, return_v)
    if return_v:
        spikes_slab, v_slab = out
        spikes = _from_slab(spikes_slab, num_elems, (num_steps,) + x_shape)
        v = _from_slab(v_slab, num_elems, (num_steps,) + x_shape)
        return spikes, v
    return _from_slab(out, num_elems, (num_steps,) + x_shape)


# ----------------------------------------------------------------------------
# Module port
# ----------------------------------------------------------------------------
class SpikingNeuron:
    """JAX/Pallas port of the PyTorch SpikingNeuron module (forward only)."""

    def __init__(self, dt=1e-06, Tsim=0.001, Cv=5e-11, Cu=3e-11, record=True):
        self.dt = dt
        self.Cv = Cv
        self.Cu = Cu
        self.Tsim = Tsim
        self.beta = dt / Cv
        self.record = record
        self.leak_mem = LEAK_MEM
        self.threshold = THRESHOLD
        self.v = None
        self.spikes = None
        self.v_t = []
        self.s_t = []
        self._v_slab = None

    def _reset_state(self, x):
        self.batch_size = x.shape[0]
        num_elems = math.prod(x.shape)
        rows_padded, _ = _slab_geometry(num_elems)
        self._v_slab = jnp.zeros((rows_padded, LANE), jnp.float32)
        self.v = jnp.zeros(x.shape, jnp.float32)
        # spikes dtype is int8 (values 0/1) to cut HBM write traffic; cast
        # outside if a consumer requires a wider integer type.
        self.spikes = jnp.zeros(x.shape, jnp.int8)
        if self.record:
            self.v_t = []
            self.s_t = []

    def forward(self, x, num_steps):
        x = jnp.asarray(x)   # keep native dtype; cast to f32 inside the kernel
        if num_steps == 0 or self._v_slab is None:
            self._reset_state(x)
        spikes, v, self._v_slab = _jit_step(self._v_slab, x)
        self.spikes, self.v = spikes, v
        if self.record:
            self.v_t.append(v)
            self.s_t.append(spikes)
        return self.spikes, self.v

    __call__ = forward

    def simulate(self, x_seq, return_v=True):
        """Fused multi-step simulation (membrane state kept in VMEM).

        x_seq: (T, *x.shape) inputs, one per step, starting from v = 0.
        With return_v=False the f32 membrane trace is never written to HBM.
        """
        x_seq = jnp.asarray(x_seq)
        if return_v:
            spikes_seq, v_seq = _jit_simulate(x_seq, return_v=True)
            self.spikes, self.v = spikes_seq[-1], v_seq[-1]
            if self.record:
                self.s_t = list(spikes_seq)
                self.v_t = list(v_seq)
            return spikes_seq, v_seq
        spikes_seq = _jit_simulate(x_seq, return_v=False)
        self.spikes = spikes_seq[-1]
        if self.record:
            self.s_t = list(spikes_seq)
        return spikes_seq, None


# ----------------------------------------------------------------------------
# Self-test
# ----------------------------------------------------------------------------
def _reference_step(v_prev, x):
    v_new = LEAK_MEM * v_prev + (1.0 - LEAK_MEM) * x
    fired = v_new > THRESHOLD
    return fired.astype(jnp.int32), jnp.where(fired, 0.0, v_new)


def _check_case(x, num_steps_total):
    ok = True
    neuron = SpikingNeuron()

    # Per-step (stateful, matches the PyTorch call pattern).
    v_ref = jnp.zeros_like(x)
    s_refs, v_refs = [], []
    for step in range(num_steps_total):
        spikes, v = neuron.forward(x, step)
        spikes = jax.block_until_ready(spikes)
        v = jax.block_until_ready(v)
        s_ref, v_ref = _reference_step(v_ref, x)
        s_refs.append(s_ref)
        v_refs.append(v_ref)
        ok &= bool(jnp.array_equal(spikes.astype(jnp.int32), s_ref))
        ok &= bool(jnp.allclose(v, v_ref, atol=1e-6))

    # Fused multi-step kernel (time loop fused into one pallas_call).
    x_seq = jnp.broadcast_to(x, (num_steps_total,) + x.shape)
    spikes_seq, v_seq = neuron.simulate(x_seq)
    spikes_seq = jax.block_until_ready(spikes_seq)
    v_seq = jax.block_until_ready(v_seq)
    ok &= bool(jnp.array_equal(spikes_seq.astype(jnp.int32), jnp.stack(s_refs)))
    ok &= bool(jnp.allclose(v_seq, jnp.stack(v_refs), atol=1e-6))

    # Spikes-only fused variant (drops the membrane-trace write stream).
    spikes_only, _ = neuron.simulate(x_seq, return_v=False)
    spikes_only = jax.block_until_ready(spikes_only)
    ok &= bool(jnp.array_equal(spikes_only, spikes_seq))
    return ok


if __name__ == "__main__":
    key = jax.random.PRNGKey(0)
    k1, k2 = jax.random.split(key)

    ok = True
    # Small NCHW input (4 lane-rows -> single padded 8-row tile).
    x1 = jax.random.uniform(k1, (2, 4, 16, 16), dtype=jnp.float32) * 10.0
    ok &= _check_case(x1, 8)
    # Larger input hitting the zero-copy slab + two-row-tile (megacore) path.
    x2 = jax.random.uniform(k2, (2, 4, 64, 64), dtype=jnp.float32) * 10.0
    ok &= _check_case(x2, 4)

    print("KERNEL_OK" if ok else "MISMATCH")
</pallas_src>

<mosaic_0001>
module attributes {stable_mosaic.version = 11 : i64} {
  func.func @_step_kernel(%arg0: i32, %arg1: memref<8x512xf32, #tpu.memory_space<vmem>>, %arg2: memref<8x512xf32, #tpu.memory_space<vmem>>, %arg3: memref<8x512xi8, #tpu.memory_space<vmem>>, %arg4: memref<8x512xf32, #tpu.memory_space<vmem>>) attributes {dimension_semantics = [#tpu.dimension_semantics<parallel>], iteration_bounds = array<i64: 1>, scalar_prefetch = 0 : i64, scratch_operands = 0 : i64, tpu.core_type = #tpu.core_type<tc>, window_params = [{transform_indices = @transform_0, window_bounds = array<i64: 8, 512>}, {transform_indices = @transform_1, window_bounds = array<i64: 8, 512>}, {transform_indices = @transform_2, window_bounds = array<i64: 8, 512>}, {transform_indices = @transform_3, window_bounds = array<i64: 8, 512>}]} {
    %c0 = arith.constant 0 : index
    %c0_0 = arith.constant 0 : index
    %0 = vector.load %arg1[%c0, %c0_0] : memref<8x512xf32, #tpu.memory_space<vmem>>, vector<8x512xf32>
    %c0_1 = arith.constant 0 : index
    %c0_2 = arith.constant 0 : index
    %1 = vector.load %arg2[%c0_1, %c0_2] : memref<8x512xf32, #tpu.memory_space<vmem>>, vector<8x512xf32>
    %cst = arith.constant 0.949999988 : f32
    %2 = vector.broadcast %cst : f32 to vector<8x512xf32>
    %3 = arith.mulf %2, %0 : vector<8x512xf32>
    %cst_3 = arith.constant 5.000000e-02 : f32
    %4 = vector.broadcast %cst_3 : f32 to vector<8x512xf32>
    %5 = arith.mulf %4, %1 : vector<8x512xf32>
    %6 = arith.addf %3, %5 : vector<8x512xf32>
    %cst_4 = arith.constant 3.000000e-01 : f32
    %7 = vector.broadcast %cst_4 : f32 to vector<8x512xf32>
    %8 = arith.cmpf ogt, %6, %7 : vector<8x512xf32>
    %9 = arith.extui %8 : vector<8x512xi1> to vector<8x512xi8>
    %cst_5 = arith.constant 0.000000e+00 : f32
    %10 = vector.broadcast %cst_5 : f32 to vector<8x512xf32>
    %11 = arith.select %8, %10, %6 : vector<8x512xi1>, vector<8x512xf32>
    %c0_6 = arith.constant 0 : index
    %c0_7 = arith.constant 0 : index
    %12 = vector.load %arg3[%c0_6, %c0_7] : memref<8x512xi8, #tpu.memory_space<vmem>>, vector<8x512xi8>
    tpu.vector_store %arg3[%c0_6, %c0_7], %9 {strides = array<i32>} : memref<8x512xi8, #tpu.memory_space<vmem>>, vector<8x512xi8>,
    %c0_8 = arith.constant 0 : index
    %c0_9 = arith.constant 0 : index
    %13 = vector.load %arg4[%c0_8, %c0_9] : memref<8x512xf32, #tpu.memory_space<vmem>>, vector<8x512xf32>
    tpu.vector_store %arg4[%c0_8, %c0_9], %11 {strides = array<i32>} : memref<8x512xf32, #tpu.memory_space<vmem>>, vector<8x512xf32>,
    return
  }
  func.func @transform_0(%arg0: i32) -> (i32, i32) {
    %c0_i32 = arith.constant 0 : i32
    %c0_i32_0 = arith.constant 0 : i32
    return %arg0, %c0_i32 : i32, i32
  }
  func.func @transform_1(%arg0: i32) -> (i32, i32) {
    %c0_i32 = arith.constant 0 : i32
    %c0_i32_0 = arith.constant 0 : i32
    return %arg0, %c0_i32 : i32, i32
  }
  func.func @transform_2(%arg0: i32) -> (i32, i32) {
    %c0_i32 = arith.constant 0 : i32
    %c0_i32_0 = arith.constant 0 : i32
    return %arg0, %c0_i32 : i32, i32
  }
  func.func @transform_3(%arg0: i32) -> (i32, i32) {
    %c0_i32 = arith.constant 0 : i32
    %c0_i32_0 = arith.constant 0 : i32
    return %arg0, %c0_i32 : i32, i32
  }
}

</mosaic_0001>

<llo_original>
// kernel: _jit_step.1
$region0: #{_jit_step.1}
  #allocation0 [shape = 'u32[]', space=smem, size = 0x4, offset = 0x4, fixed_abs, tag = 'smem constant byte address 0x4 - core index']
  #allocation1 [shape = 'u32[72,128]{1,0:T(1,128)}', space=vmem, size = 0x9000, scoped, tag = 'internal scratch']
  %s0 = inlined_call_operand.vmem [shape: f32[8,512], index: 0, kind: input, shape index: {}, may-alias: {0,3}]
  %s1 = inlined_call_operand.vmem [shape: f32[8,512], index: 1, kind: input, shape index: {}]
  %s2 = inlined_call_operand.vmem [shape: s8[8,512], index: 2, kind: output, shape index: {0}]
  %s3 = inlined_call_operand.vmem [shape: f32[8,512], index: 3, kind: output, shape index: {1}, may-alias: {0,3}]
  %4 = xla_tuple %s2, %s3
  %s5 = sld [smem:[#allocation0]]
  $region26: #{_jit_step.1} parent=0
    _
  %s7 = ssub.s32 1, %s5
  %s8 = scalar_select 0, %s7, %s5
  // Predicated region
  $region2: #{_jit_step.1} parent=0 // pred_check
    _
  $region3: #{_jit_step.1} parent=0 // pred_check_branch
    %10 = sbr.rel (0) target = $region5
  $region4: #{_jit_step.1} parent=0 // pred_region
    _
  $region5: #{_jit_step.1} parent=0 // pred_fallthru
    _
  // Predicated region
  $region6: #{_jit_step.1} parent=0 // pred_check
    _
  $region7: #{_jit_step.1} parent=0 // pred_check_branch
    %12 = sbr.rel (0) target = $region9
  $region8: #{_jit_step.1} parent=0 // pred_region
    _
  $region9: #{_jit_step.1} parent=0 // pred_fallthru
    _
  %v15 = vld [vmem:[%s0] sm:$0xff]
  %v16 = vld [vmem:[%s0 + $0x8] sm:$0xff]
  %v17 = vld [vmem:[%s0 + $0x10] sm:$0xff]
  %v18 = vld [vmem:[%s0 + $0x18] sm:$0xff]
  %v19 = vld [vmem:[%s1] sm:$0xff]
  %v20 = vld [vmem:[%s1 + $0x8] sm:$0xff]
  %v21 = vld [vmem:[%s1 + $0x10] sm:$0xff]
  %v22 = vld [vmem:[%s1 + $0x18] sm:$0xff]
  %v23 = vmul.f32 %v15, 0.95
  %v24 = vmul.f32 %v16, 0.95
  %v25 = vmul.f32 %v17, 0.95
  %v26 = vmul.f32 %v18, 0.95
  %v27 = vmul.f32 %v19, 0.05
  %v28 = vmul.f32 %v20, 0.05
  %v29 = vmul.f32 %v21, 0.05
  %v30 = vmul.f32 %v22, 0.05
  %v31 = vadd.f32 %v23, %v27
  %v32 = vadd.f32 %v24, %v28
  %v33 = vadd.f32 %v25, %v29
  %v34 = vadd.f32 %v26, %v30
  %vm35 = vcmp.gt.f32.partialorder %v31, 0.3
  %vm36 = vcmp.gt.f32.partialorder %v32, 0.3
  %vm37 = vcmp.gt.f32.partialorder %v33, 0.3
  %vm38 = vcmp.gt.f32.partialorder %v34, 0.3
  %vm39 = vmpackc.low %vm35, %vm35
  %v40 = vsel %vm39, 16711935, 0
  %v41 = vsel %vm39, 16711935, 0
  %v42 = vpack.c.b8 %v41, %v40
  %vm43 = vnez %v42
  %vm44 = vmpackc.low %vm36, %vm36
  %v45 = vsel %vm44, 16711935, 0
  %v46 = vsel %vm44, 16711935, 0
  %v47 = vpack.c.b8 %v46, %v45
  %vm48 = vnez %v47
  %vm49 = vmpackc.low %vm37, %vm37
  %v50 = vsel %vm49, 16711935, 0
  %v51 = vsel %vm49, 16711935, 0
  %v52 = vpack.c.b8 %v51, %v50
  %vm53 = vnez %v52
  %vm54 = vmpackc.low %vm38, %vm38
  %v55 = vsel %vm54, 16711935, 0
  %v56 = vsel %vm54, 16711935, 0
  %v57 = vpack.c.b8 %v56, %v55
  %vm58 = vnez %v57
  %v59 = vsel %vm43, 16843009, 0
  %v60 = vsel %vm48, 16843009, 0
  %v61 = vsel %vm53, 16843009, 0
  %v62 = vsel %vm58, 16843009, 0
  %v63 = vsel %vm35, 0.0, %v31
  %v64 = vsel %vm36, 0.0, %v32
  %v65 = vsel %vm37, 0.0, %v33
  %v66 = vsel %vm38, 0.0, %v34
  %v67 = vunpack.c.0.s8 %v59
  %v68 = vunpack.c.0.s8 %v60
  %v69 = vunpack.c.0.s8 %v61
  %v70 = vunpack.c.0.s8 %v62
  %v71 = vpack.c.b16 %v68, %v67
  %v72 = vpack.c.b16 %v70, %v69
  %v73 = vpack.c.b8 %v72, %v71
  %74 = vst [vmem:[%s2] sm:$0xff] %v73
  %75 = vst [vmem:[%s3] sm:$0xff] %v63
  %76 = vst [vmem:[%s3 + $0x8] sm:$0xff] %v64
  %77 = vst [vmem:[%s3 + $0x10] sm:$0xff] %v65
  %78 = vst [vmem:[%s3 + $0x18] sm:$0xff] %v66
  // Predicated region
  $region10: #{_jit_step.1} parent=0 // pred_check
    _
  $region11: #{_jit_step.1} parent=0 // pred_check_branch
    %80 = sbr.rel (0) target = $region13
  $region12: #{_jit_step.1} parent=0 // pred_region
    _
  $region13: #{_jit_step.1} parent=0 // pred_fallthru
    _
  // Predicated region
  $region14: #{_jit_step.1} parent=0 // pred_check
    _
  $region15: #{_jit_step.1} parent=0 // pred_check_branch
    %82 = sbr.rel (0) target = $region17
  $region16: #{_jit_step.1} parent=0 // pred_region
    _
  $region17: #{_jit_step.1} parent=0 // pred_fallthru
    _
  // Predicated region
  $region18: #{_jit_step.1} parent=0 // pred_check
    _
  $region19: #{_jit_step.1} parent=0 // pred_check_branch
    %84 = sbr.rel (0) target = $region21
  $region20: #{_jit_step.1} parent=0 // pred_region
    _
  $region21: #{_jit_step.1} parent=0 // pred_fallthru
    _
  // Predicated region
  $region22: #{_jit_step.1} parent=0 // pred_check
    _
  $region23: #{_jit_step.1} parent=0 // pred_check_branch
    %86 = sbr.rel (0) target = $region25
  $region24: #{_jit_step.1} parent=0 // pred_region
    _
  $region25: #{_jit_step.1} parent=0 // pred_fallthru
    _

</llo_original>
